<compile_context>
chip_gen: v5e
topology: v5e:2x2
jax: 0.10.0
libtpu: 0.0.40
codegen_flags: <defaults>
</compile_context>

<pallas_src>
import math

import jax
import jax.numpy as jnp
from jax.experimental import pallas as pl
from jax.experimental.pallas import tpu as pltpu

BN_EPS = 1e-5


def _make_kernel(B, N, F, offs):
    """Build the fused GC_Block kernel for static (B, N, F) and slab offsets."""
    BF = B * F

    def fused_bn(y, bias, g, be):
        # y: (N, B*F) with batch blocks along lanes; bias: (1, F); g, be: (N, F).
        # Training-mode BatchNorm over the batch axis, fused into scale/shift.
        cols = [y[:, b * F:(b + 1) * F] + bias for b in range(B)]
        mean = cols[0]
        for c in cols[1:]:
            mean = mean + c
        mean = mean * (1.0 / B)
        var = (cols[0] - mean) ** 2
        for c in cols[1:]:
            var = var + (c - mean) ** 2
        var = var * (1.0 / B)
        scale = g * jax.lax.rsqrt(var + BN_EPS)
        shift = be - mean * scale
        return jnp.concatenate([c * scale + shift for c in cols], axis=1)

    def kernel(x_ref, mm_ref, bn_ref, o_ref):
        x2 = x_ref[...]                                            # (N, B*F) f32

        # ---- carve parameter slabs (static views) -------------------------
        att1 = mm_ref[offs["att1"]:offs["att1"] + N, 0:N]
        att2 = mm_ref[offs["att2"]:offs["att2"] + N, 0:N]
        w1 = mm_ref[offs["w1"]:offs["w1"] + BF, 0:BF]              # blockdiag(W1)
        w2 = mm_ref[offs["w2"]:offs["w2"] + BF, 0:BF]              # blockdiag(W2)

        g1 = bn_ref[offs["g1"]:offs["g1"] + N, :]
        be1 = bn_ref[offs["be1"]:offs["be1"] + N, :]
        g2 = bn_ref[offs["g2"]:offs["g2"] + N, :]
        be2 = bn_ref[offs["be2"]:offs["be2"] + N, :]
        b1 = bn_ref[offs["b1"]:offs["b1"] + 1, :]
        b2 = bn_ref[offs["b2"]:offs["b2"] + 1, :]

        mmt = w1.dtype   # matmul operand dtype (bf16 fast path or f32)

        # ---- gc1: two wide MXU matmuls ------------------------------------
        s1 = jnp.dot(x2.astype(mmt), w1, preferred_element_type=jnp.float32)
        y1 = jnp.dot(att1, s1.astype(mmt), preferred_element_type=jnp.float32)
        # ---- bias + bn1 (fused) + tanh  (dropout == identity) -------------
        y1 = jnp.tanh(fused_bn(y1, b1, g1, be1))

        # ---- gc2 ------------------------------------------------------------
        s2 = jnp.dot(y1.astype(mmt), w2, preferred_element_type=jnp.float32)
        y2 = jnp.dot(att2, s2.astype(mmt), preferred_element_type=jnp.float32)
        y2 = jnp.tanh(fused_bn(y2, b2, g2, be2))

        # ---- residual --------------------------------------------------------
        o_ref[...] = y2 + x2

    return kernel


def gc_block(x, params, use_bf16=True):
    """x: (B, N, F) float32; params: dict of fp32 parameter arrays."""
    B, N, F = x.shape
    BF = B * F
    f32 = jnp.float32
    mm_dtype = jnp.bfloat16 if use_bf16 else f32

    # Lane-merged input layout: (N, B*F), batch blocks along lanes.
    x2 = jnp.transpose(x, (1, 0, 2)).reshape(N, BF).astype(f32)

    # ---- matmul-operand slab: att1 | att2 | blockdiag(W1) | blockdiag(W2) ----
    # (In a real model these slabs would be packed once, not per call.)
    eye_b = jnp.eye(B, dtype=f32)
    w1_bd = jnp.kron(eye_b, params["w1"].astype(f32))
    w2_bd = jnp.kron(eye_b, params["w2"].astype(f32))
    lane_w = max(N, BF)

    def pad_lanes(a):
        return jnp.pad(a, ((0, 0), (0, lane_w - a.shape[1])))

    offs = {}
    mm_rows, r = [], 0
    for name, a in (("att1", params["att1"]), ("att2", params["att2"]),
                    ("w1", w1_bd), ("w2", w2_bd)):
        offs[name] = r
        mm_rows.append(pad_lanes(a.astype(f32)))
        r += a.shape[0]
    mm_slab = jnp.concatenate(mm_rows, axis=0).astype(mm_dtype)

    # ---- BN / bias slab (fp32, lane width F) ----------------------------------
    bn_rows, r = [], 0
    for name, a in (("g1", params["g1"]), ("be1", params["beta1"]),
                    ("g2", params["g2"]), ("be2", params["beta2"]),
                    ("b1", params["b1"]), ("b2", params["b2"])):
        offs[name] = r
        bn_rows.append(a.astype(f32))
        r += a.shape[0]
    bn_slab = jnp.concatenate(bn_rows, axis=0)

    kernel = _make_kernel(B, N, F, offs)
    vmem = pl.BlockSpec(memory_space=pltpu.MemorySpace.VMEM)

    o2 = pl.pallas_call(
        kernel,
        out_shape=jax.ShapeDtypeStruct((N, BF), f32),
        in_specs=[vmem, vmem, vmem],
        out_specs=vmem,
    )(x2, mm_slab, bn_slab)

    # Back to the module's (B, N, F) layout.
    return jnp.transpose(o2.reshape(N, B, F), (1, 0, 2))


def init_params(key, node_n, in_features):
    """Deterministic init matching GraphConvolution.reset_parameters + BN defaults."""
    stdv = 1.0 / math.sqrt(in_features)
    keys = jax.random.split(key, 6)

    def u(k, shape):
        return jax.random.uniform(k, shape, jnp.float32, minval=-stdv, maxval=stdv)

    return {
        "w1":   u(keys[0], (in_features, in_features)),
        "att1": u(keys[1], (node_n, node_n)),
        "b1":   u(keys[2], (1, in_features)),
        "w2":   u(keys[3], (in_features, in_features)),
        "att2": u(keys[4], (node_n, node_n)),
        "b2":   u(keys[5], (1, in_features)),
        # BatchNorm1d(node_n * in_features) defaults: weight=1, bias=0,
        # reshaped to (node_n, in_features) so they broadcast over batch.
        "g1":    jnp.ones((node_n, in_features), jnp.float32),
        "beta1": jnp.zeros((node_n, in_features), jnp.float32),
        "g2":    jnp.ones((node_n, in_features), jnp.float32),
        "beta2": jnp.zeros((node_n, in_features), jnp.float32),
    }


def gc_block_ref(x, p, mm_dtype=jnp.float32):
    """Pure-JAX reference of the same forward (PyTorch semantics)."""
    def gcn(h, w, att, b):
        support = jnp.einsum("bnf,fg->bng", h.astype(mm_dtype), w.astype(mm_dtype),
                             preferred_element_type=jnp.float32)
        out = jnp.einsum("nm,bmg->bng", att.astype(mm_dtype), support.astype(mm_dtype),
                         preferred_element_type=jnp.float32)
        return out + b[None]

    def bn(h, g, be):
        m = jnp.mean(h, axis=0, keepdims=True)
        v = jnp.mean((h - m) ** 2, axis=0, keepdims=True)
        return (h - m) * jax.lax.rsqrt(v + BN_EPS) * g[None] + be[None]

    y = jnp.tanh(bn(gcn(x, p["w1"], p["att1"], p["b1"]), p["g1"], p["beta1"]))
    y = jnp.tanh(bn(gcn(y, p["w2"], p["att2"], p["b2"]), p["g2"], p["beta2"]))
    return y + x


if __name__ == "__main__":
    B, NODE_N, F = 2, 48, 16          # node_n=48 matches the module default
    key = jax.random.PRNGKey(0)
    kx, kp = jax.random.split(key)
    x = jax.random.normal(kx, (B, NODE_N, F), dtype=jnp.float32)
    params = init_params(kp, NODE_N, F)

    gc_fn = jax.jit(gc_block, static_argnames=("use_bf16",))

    # --- exact path: f32 MXU matmuls vs faithful f32 reference ---------------
    out_f32 = jax.block_until_ready(gc_fn(x, params, use_bf16=False))
    ref_f32 = jax.block_until_ready(gc_block_ref(x, params))
    assert out_f32.shape == (B, NODE_N, F)
    assert jnp.allclose(out_f32, ref_f32, atol=1e-3, rtol=1e-3), "f32 path mismatch"

    # --- default fast path: bf16 MXU operands, fp32 accumulation --------------
    # Note: batch-of-2 training-mode BN divides by the (tiny-sample) batch std,
    # which strongly amplifies per-element precision differences, so the bf16
    # path is checked against a reference that applies the same bf16 casts.
    out_bf16 = jax.block_until_ready(gc_fn(x, params, use_bf16=True))
    ref_bf16 = jax.block_until_ready(gc_block_ref(x, params, mm_dtype=jnp.bfloat16))
    assert out_bf16.shape == (B, NODE_N, F)
    assert jnp.allclose(out_bf16, ref_bf16, atol=3e-2, rtol=3e-2), "bf16 path mismatch"

    print("KERNEL_OK")
</pallas_src>

<mosaic_0001>
module attributes {stable_mosaic.version = 11 : i64} {
  func.func @kernel(%arg0: memref<48x32xf32, #tpu.memory_space<vmem>>, %arg1: memref<160x48xf32, #tpu.memory_space<vmem>>, %arg2: memref<194x16xf32, #tpu.memory_space<vmem>>, %arg3: memref<48x32xf32, #tpu.memory_space<vmem>>) attributes {dimension_semantics = [], scalar_prefetch = 0 : i64, scratch_operands = 0 : i64, tpu.core_type = #tpu.core_type<tc>} {
    %c0 = arith.constant 0 : index
    %c0_0 = arith.constant 0 : index
    %0 = vector.load %arg0[%c0, %c0_0] : memref<48x32xf32, #tpu.memory_space<vmem>>, vector<48x32xf32>
    %c0_1 = arith.constant 0 : index
    %c0_2 = arith.constant 0 : index
    %1 = vector.load %arg1[%c0_1, %c0_2] : memref<160x48xf32, #tpu.memory_space<vmem>>, vector<48x48xf32>
    %c48 = arith.constant 48 : index
    %c0_3 = arith.constant 0 : index
    %2 = vector.load %arg1[%c48, %c0_3] : memref<160x48xf32, #tpu.memory_space<vmem>>, vector<48x48xf32>
    %c96 = arith.constant 96 : index
    %c0_4 = arith.constant 0 : index
    %3 = vector.load %arg1[%c96, %c0_4] : memref<160x48xf32, #tpu.memory_space<vmem>>, vector<32x32xf32>
    %c128 = arith.constant 128 : index
    %c0_5 = arith.constant 0 : index
    %4 = vector.load %arg1[%c128, %c0_5] : memref<160x48xf32, #tpu.memory_space<vmem>>, vector<32x32xf32>
    %c0_6 = arith.constant 0 : index
    %c0_7 = arith.constant 0 : index
    %5 = vector.load %arg2[%c0_6, %c0_7] : memref<194x16xf32, #tpu.memory_space<vmem>>, vector<48x16xf32>
    %c48_8 = arith.constant 48 : index
    %c0_9 = arith.constant 0 : index
    %6 = vector.load %arg2[%c48_8, %c0_9] : memref<194x16xf32, #tpu.memory_space<vmem>>, vector<48x16xf32>
    %c96_10 = arith.constant 96 : index
    %c0_11 = arith.constant 0 : index
    %7 = vector.load %arg2[%c96_10, %c0_11] : memref<194x16xf32, #tpu.memory_space<vmem>>, vector<48x16xf32>
    %c144 = arith.constant 144 : index
    %c0_12 = arith.constant 0 : index
    %8 = vector.load %arg2[%c144, %c0_12] : memref<194x16xf32, #tpu.memory_space<vmem>>, vector<48x16xf32>
    %c192 = arith.constant 192 : index
    %c0_13 = arith.constant 0 : index
    %9 = vector.load %arg2[%c192, %c0_13] : memref<194x16xf32, #tpu.memory_space<vmem>>, vector<1x16xf32>
    %c193 = arith.constant 193 : index
    %c0_14 = arith.constant 0 : index
    %10 = vector.load %arg2[%c193, %c0_14] : memref<194x16xf32, #tpu.memory_space<vmem>>, vector<1x16xf32>
    %cst = arith.constant dense<0.000000e+00> : vector<48x32xf32>
    %11 = tpu.matmul %0, %3, %cst {dimension_numbers = #tpu.dot_dimension_numbers<[1], [0], [0], [1], [0, 0, 1, 1], [], []>} : vector<48x32xf32>, vector<32x32xf32>, vector<48x32xf32> -> vector<48x32xf32>
    %cst_15 = arith.constant dense<0.000000e+00> : vector<48x32xf32>
    %12 = tpu.matmul %1, %11, %cst_15 {dimension_numbers = #tpu.dot_dimension_numbers<[1], [0], [0], [1], [0, 0, 1, 1], [], []>} : vector<48x48xf32>, vector<48x32xf32>, vector<48x32xf32> -> vector<48x32xf32>
    %13 = vector.extract_strided_slice %12 {offsets = [0, 0], sizes = [48, 16], strides = [1, 1]} : vector<48x32xf32> to vector<48x16xf32>
    %14 = vector.broadcast %9 : vector<1x16xf32> to vector<48x16xf32>
    %15 = arith.addf %13, %14 : vector<48x16xf32>
    %16 = vector.extract_strided_slice %12 {offsets = [0, 16], sizes = [48, 16], strides = [1, 1]} : vector<48x32xf32> to vector<48x16xf32>
    %17 = vector.broadcast %9 : vector<1x16xf32> to vector<48x16xf32>
    %18 = arith.addf %16, %17 : vector<48x16xf32>
    %19 = arith.addf %15, %18 : vector<48x16xf32>
    %cst_16 = arith.constant 5.000000e-01 : f32
    %20 = vector.broadcast %cst_16 : f32 to vector<48x16xf32>
    %21 = arith.mulf %19, %20 : vector<48x16xf32>
    %22 = arith.subf %15, %21 : vector<48x16xf32>
    %23 = arith.mulf %22, %22 : vector<48x16xf32>
    %24 = arith.subf %18, %21 : vector<48x16xf32>
    %25 = arith.mulf %24, %24 : vector<48x16xf32>
    %26 = arith.addf %23, %25 : vector<48x16xf32>
    %cst_17 = arith.constant 5.000000e-01 : f32
    %27 = vector.broadcast %cst_17 : f32 to vector<48x16xf32>
    %28 = arith.mulf %26, %27 : vector<48x16xf32>
    %cst_18 = arith.constant 9.99999974E-6 : f32
    %29 = vector.broadcast %cst_18 : f32 to vector<48x16xf32>
    %30 = arith.addf %28, %29 : vector<48x16xf32>
    %31 = math.rsqrt %30 : vector<48x16xf32>
    %32 = arith.mulf %5, %31 : vector<48x16xf32>
    %33 = arith.mulf %21, %32 : vector<48x16xf32>
    %34 = arith.subf %6, %33 : vector<48x16xf32>
    %35 = arith.mulf %15, %32 : vector<48x16xf32>
    %36 = arith.addf %35, %34 : vector<48x16xf32>
    %37 = arith.mulf %18, %32 : vector<48x16xf32>
    %38 = arith.addf %37, %34 : vector<48x16xf32>
    %39 = tpu.concatenate %36, %38 in 1 : vector<48x16xf32>, vector<48x16xf32> -> vector<48x32xf32>
    %40 = math.tanh %39 : vector<48x32xf32>
    %cst_19 = arith.constant dense<0.000000e+00> : vector<48x32xf32>
    %41 = tpu.matmul %40, %4, %cst_19 {dimension_numbers = #tpu.dot_dimension_numbers<[1], [0], [0], [1], [0, 0, 1, 1], [], []>} : vector<48x32xf32>, vector<32x32xf32>, vector<48x32xf32> -> vector<48x32xf32>
    %cst_20 = arith.constant dense<0.000000e+00> : vector<48x32xf32>
    %42 = tpu.matmul %2, %41, %cst_20 {dimension_numbers = #tpu.dot_dimension_numbers<[1], [0], [0], [1], [0, 0, 1, 1], [], []>} : vector<48x48xf32>, vector<48x32xf32>, vector<48x32xf32> -> vector<48x32xf32>
    %43 = vector.extract_strided_slice %42 {offsets = [0, 0], sizes = [48, 16], strides = [1, 1]} : vector<48x32xf32> to vector<48x16xf32>
    %44 = vector.broadcast %10 : vector<1x16xf32> to vector<48x16xf32>
    %45 = arith.addf %43, %44 : vector<48x16xf32>
    %46 = vector.extract_strided_slice %42 {offsets = [0, 16], sizes = [48, 16], strides = [1, 1]} : vector<48x32xf32> to vector<48x16xf32>
    %47 = vector.broadcast %10 : vector<1x16xf32> to vector<48x16xf32>
    %48 = arith.addf %46, %47 : vector<48x16xf32>
    %49 = arith.addf %45, %48 : vector<48x16xf32>
    %cst_21 = arith.constant 5.000000e-01 : f32
    %50 = vector.broadcast %cst_21 : f32 to vector<48x16xf32>
    %51 = arith.mulf %49, %50 : vector<48x16xf32>
    %52 = arith.subf %45, %51 : vector<48x16xf32>
    %53 = arith.mulf %52, %52 : vector<48x16xf32>
    %54 = arith.subf %48, %51 : vector<48x16xf32>
    %55 = arith.mulf %54, %54 : vector<48x16xf32>
    %56 = arith.addf %53, %55 : vector<48x16xf32>
    %cst_22 = arith.constant 5.000000e-01 : f32
    %57 = vector.broadcast %cst_22 : f32 to vector<48x16xf32>
    %58 = arith.mulf %56, %57 : vector<48x16xf32>
    %cst_23 = arith.constant 9.99999974E-6 : f32
    %59 = vector.broadcast %cst_23 : f32 to vector<48x16xf32>
    %60 = arith.addf %58, %59 : vector<48x16xf32>
    %61 = math.rsqrt %60 : vector<48x16xf32>
    %62 = arith.mulf %7, %61 : vector<48x16xf32>
    %63 = arith.mulf %51, %62 : vector<48x16xf32>
    %64 = arith.subf %8, %63 : vector<48x16xf32>
    %65 = arith.mulf %45, %62 : vector<48x16xf32>
    %66 = arith.addf %65, %64 : vector<48x16xf32>
    %67 = arith.mulf %48, %62 : vector<48x16xf32>
    %68 = arith.addf %67, %64 : vector<48x16xf32>
    %69 = tpu.concatenate %66, %68 in 1 : vector<48x16xf32>, vector<48x16xf32> -> vector<48x32xf32>
    %70 = math.tanh %69 : vector<48x32xf32>
    %71 = arith.addf %70, %0 : vector<48x32xf32>
    %c0_24 = arith.constant 0 : index
    %c0_25 = arith.constant 0 : index
    %72 = vector.load %arg3[%c0_24, %c0_25] : memref<48x32xf32, #tpu.memory_space<vmem>>, vector<48x32xf32>
    tpu.vector_store %arg3[%c0_24, %c0_25], %71 {strides = array<i32>} : memref<48x32xf32, #tpu.memory_space<vmem>>, vector<48x32xf32>,
    return
  }
}

</mosaic_0001>

<llo_original>
// kernel: gc_block.1
$region0: #{gc_block.1}
  #allocation0 [shape = 'u32[]', space=smem, size = 0x4, offset = 0x4, fixed_abs, tag = 'smem constant byte address 0x4 - core index']
  #allocation1 [shape = 'u32[72,128]{1,0:T(1,128)}', space=vmem, size = 0x9000, scoped, tag = 'internal scratch']
  %s0 = inlined_call_operand.vmem [shape: f32[48,32], index: 0, kind: input, shape index: {}]
  %s1 = inlined_call_operand.vmem [shape: f32[160,48], index: 1, kind: input, shape index: {}]
  %s2 = inlined_call_operand.vmem [shape: f32[194,16], index: 2, kind: input, shape index: {}]
  %s3 = inlined_call_operand.vmem [shape: f32[48,32], index: 3, kind: output, shape index: {}]
  %s4 = sld [smem:[#allocation0]]
  $region22: #{gc_block.1} parent=0
    _
  %s6 = ssub.s32 1, %s4
  %s7 = scalar_select 0, %s6, %s4
  // Predicated region
  $region2: #{gc_block.1} parent=0 // pred_check
    _
  $region3: #{gc_block.1} parent=0 // pred_check_branch
    %9 = sbr.rel (0) target = $region5
  $region4: #{gc_block.1} parent=0 // pred_region
    _
  $region5: #{gc_block.1} parent=0 // pred_fallthru
    _
  // Predicated region
  $region6: #{gc_block.1} parent=0 // pred_check
    _
  $region7: #{gc_block.1} parent=0 // pred_check_branch
    %11 = sbr.rel (0) target = $region9
  $region8: #{gc_block.1} parent=0 // pred_region
    _
  $region9: #{gc_block.1} parent=0 // pred_fallthru
    _
  // Predicated region
  $region10: #{gc_block.1} parent=0 // pred_check
    _
  $region11: #{gc_block.1} parent=0 // pred_check_branch
    %13 = sbr.rel (0) target = $region13
  $region12: #{gc_block.1} parent=0 // pred_region
    _
  $region13: #{gc_block.1} parent=0 // pred_fallthru
    _
  %v14 = vld [vmem:[%s0] sm:$0xff]
  %v15 = vld [vmem:[%s0 + $0x8] sm:$0xff]
  %v16 = vld [vmem:[%s0 + $0x10] sm:$0xff]
  %v17 = vld [vmem:[%s0 + $0x18] sm:$0xff]
  %v18 = vld [vmem:[%s0 + $0x20] sm:$0xff]
  %v19 = vld [vmem:[%s0 + $0x28] sm:$0xff]
  %v20 = vld [vmem:[%s1] sm:$0xff]
  %v21 = vld [vmem:[%s1 + $0x8] sm:$0xff]
  %v22 = vld [vmem:[%s1 + $0x10] sm:$0xff]
  %v23 = vld [vmem:[%s1 + $0x18] sm:$0xff]
  %v24 = vld [vmem:[%s1 + $0x20] sm:$0xff]
  %v25 = vld [vmem:[%s1 + $0x28] sm:$0xff]
  %v26 = vld [vmem:[%s1 + $0x30] sm:$0xff]
  %v27 = vld [vmem:[%s1 + $0x38] sm:$0xff]
  %v28 = vld [vmem:[%s1 + $0x40] sm:$0xff]
  %v29 = vld [vmem:[%s1 + $0x48] sm:$0xff]
  %v30 = vld [vmem:[%s1 + $0x50] sm:$0xff]
  %v31 = vld [vmem:[%s1 + $0x58] sm:$0xff]
  %v32 = vld [vmem:[%s1 + $0x60] sm:$0xff]
  %v33 = vld [vmem:[%s1 + $0x68] sm:$0xff]
  %v34 = vld [vmem:[%s1 + $0x70] sm:$0xff]
  %v35 = vld [vmem:[%s1 + $0x78] sm:$0xff]
  %v36 = vld [vmem:[%s1 + $0x80] sm:$0xff]
  %v37 = vld [vmem:[%s1 + $0x88] sm:$0xff]
  %v38 = vld [vmem:[%s1 + $0x90] sm:$0xff]
  %v39 = vld [vmem:[%s1 + $0x98] sm:$0xff]
  %v40 = vld [vmem:[%s2] sm:$0xff]
  %v41 = vld [vmem:[%s2 + $0x8] sm:$0xff]
  %v42 = vld [vmem:[%s2 + $0x10] sm:$0xff]
  %v43 = vld [vmem:[%s2 + $0x18] sm:$0xff]
  %v44 = vld [vmem:[%s2 + $0x20] sm:$0xff]
  %v45 = vld [vmem:[%s2 + $0x28] sm:$0xff]
  %v46 = vld [vmem:[%s2 + $0x30] sm:$0xff]
  %v47 = vld [vmem:[%s2 + $0x38] sm:$0xff]
  %v48 = vld [vmem:[%s2 + $0x40] sm:$0xff]
  %v49 = vld [vmem:[%s2 + $0x48] sm:$0xff]
  %v50 = vld [vmem:[%s2 + $0x50] sm:$0xff]
  %v51 = vld [vmem:[%s2 + $0x58] sm:$0xff]
  %v52 = vld [vmem:[%s2 + $0x60] sm:$0xff]
  %v53 = vld [vmem:[%s2 + $0x68] sm:$0xff]
  %v54 = vld [vmem:[%s2 + $0x70] sm:$0xff]
  %v55 = vld [vmem:[%s2 + $0x78] sm:$0xff]
  %v56 = vld [vmem:[%s2 + $0x80] sm:$0xff]
  %v57 = vld [vmem:[%s2 + $0x88] sm:$0xff]
  %v58 = vld [vmem:[%s2 + $0x90] sm:$0xff]
  %v59 = vld [vmem:[%s2 + $0x98] sm:$0xff]
  %v60 = vld [vmem:[%s2 + $0xa0] sm:$0xff]
  %v61 = vld [vmem:[%s2 + $0xa8] sm:$0xff]
  %v62 = vld [vmem:[%s2 + $0xb0] sm:$0xff]
  %v63 = vld [vmem:[%s2 + $0xb8] sm:$0xff]
  %v64 = vld [vmem:[%s2 + $0xc0] sm:$0x1]
  %v65 = vld [vmem:[%s2 + $0xc1] sm:$0x1]
  %vm66 = vcmask 261120
  %v68 = vsel %vm66, %v14, 0
  %v71 = vsel %vm66, %v15, 0
  %v74 = vsel %vm66, %v16, 0
  %v77 = vsel %vm66, %v17, 0
  %v80 = vsel %vm66, %v18, 0
  %v83 = vsel %vm66, %v19, 0
  %85 = vmatpush.msra.mxu0 0.0
  %86 = vmatpush.msra.mxu0 0.0
  %87 = vmatpush.msra.mxu0 0.0
  %88 = vmatpush.msra.mxu0 0.0
  %89 = vmatpush.msra.mxu0 0.0
  %90 = vmatpush.msra.mxu0 0.0
  %91 = vmatpush.msra.mxu0 0.0
  %92 = vmatpush.msra.mxu0 0.0
  %93 = vmatpush.msra.mxu0 0.0
  %94 = vmatpush.msra.mxu0 0.0
  %95 = vmatpush.msra.mxu0 0.0
  %96 = vmatpush.msra.mxu0 0.0
  %97 = vmatpush.msra.mxu0 %v35
  %98 = vmatpush.msra.mxu0 %v34
  %99 = vmatpush.msra.mxu0 %v33
  %100 = vmatpush.msra.mxu0 %v32
  %101 = vmatmul.f32.gmra.mxu0 %v68
  %v102 = vpop.f32.mrf.mxu0
  %v103 = vadd.f32 0.0, %v102
  %104 = vmatmul.f32.gmra.mxu0 %v71
  %v105 = vpop.f32.mrf.mxu0
  %v106 = vadd.f32 0.0, %v105
  %107 = vmatmul.f32.gmra.mxu0 %v74
  %v108 = vpop.f32.mrf.mxu0
  %v109 = vadd.f32 0.0, %v108
  %110 = vmatmul.f32.gmra.mxu0 %v77
  %v111 = vpop.f32.mrf.mxu0
  %v112 = vadd.f32 0.0, %v111
  %113 = vmatmul.f32.gmra.mxu0 %v80
  %v114 = vpop.f32.mrf.mxu0
  %v115 = vadd.f32 0.0, %v114
  %116 = vmatmul.f32.gmra.mxu0 %v83
  %v117 = vpop.f32.mrf.mxu0
  %v118 = vadd.f32 0.0, %v117
  %119 = vdwg.mxu0
  %vm120 = vcmask 392192
  %v122 = vsel %vm120, %v20, 0
  %v125 = vsel %vm120, %v21, 0
  %v128 = vsel %vm120, %v22, 0
  %v131 = vsel %vm120, %v23, 0
  %v134 = vsel %vm120, %v24, 0
  %v137 = vsel %vm120, %v25, 0
  %139 = vmatpush.msra.mxu0 0.0
  %140 = vmatpush.msra.mxu0 0.0
  %141 = vmatpush.msra.mxu0 0.0
  %142 = vmatpush.msra.mxu0 0.0
  %143 = vmatpush.msra.mxu0 0.0
  %144 = vmatpush.msra.mxu0 0.0
  %145 = vmatpush.msra.mxu0 0.0
  %146 = vmatpush.msra.mxu0 0.0
  %147 = vmatpush.msra.mxu0 0.0
  %148 = vmatpush.msra.mxu0 0.0
  %149 = vmatpush.msra.mxu0 %v118
  %150 = vmatpush.msra.mxu0 %v115
  %151 = vmatpush.msra.mxu0 %v112
  %152 = vmatpush.msra.mxu0 %v109
  %153 = vmatpush.msra.mxu0 %v106
  %154 = vmatpush.msra.mxu0 %v103
  %155 = vmatmul.f32.gmra.mxu0 %v122
  %v156 = vpop.f32.mrf.mxu0
  %v157 = vadd.f32 0.0, %v156
  %158 = vmatmul.f32.gmra.mxu0 %v125
  %v159 = vpop.f32.mrf.mxu0
  %v160 = vadd.f32 0.0, %v159
  %161 = vmatmul.f32.gmra.mxu0 %v128
  %v162 = vpop.f32.mrf.mxu0
  %v163 = vadd.f32 0.0, %v162
  %164 = vmatmul.f32.gmra.mxu0 %v131
  %v165 = vpop.f32.mrf.mxu0
  %v166 = vadd.f32 0.0, %v165
  %167 = vmatmul.f32.gmra.mxu0 %v134
  %v168 = vpop.f32.mrf.mxu0
  %v169 = vadd.f32 0.0, %v168
  %170 = vmatmul.f32.gmra.mxu0 %v137
  %v171 = vpop.f32.mrf.mxu0
  %v172 = vadd.f32 0.0, %v171
  %173 = vdwg.mxu0
  %v174 = vperm.slane %v64, 0
  %v175 = vadd.f32 %v157, %v174
  %v176 = vadd.f32 %v160, %v174
  %v177 = vadd.f32 %v163, %v174
  %v178 = vadd.f32 %v166, %v174
  %v179 = vadd.f32 %v169, %v174
  %v180 = vadd.f32 %v172, %v174
  %182 = vrot.lane.b32.xlu0 %v174, 16
  %v183 = vpop.permute.xlu0 %182
  %v185 = vadd.f32 %v157, %v183
  %v186 = vadd.f32 %v160, %v183
  %v187 = vadd.f32 %v163, %v183
  %v188 = vadd.f32 %v166, %v183
  %v189 = vadd.f32 %v169, %v183
  %v190 = vadd.f32 %v172, %v183
  %197 = vrot.lane.b32.xlu0 %v185, 112
  %v198 = vpop.permute.xlu0 %197
  %199 = vrot.lane.b32.xlu0 %v186, 112
  %v200 = vpop.permute.xlu0 %199
  %201 = vrot.lane.b32.xlu0 %v187, 112
  %v202 = vpop.permute.xlu0 %201
  %203 = vrot.lane.b32.xlu0 %v188, 112
  %v204 = vpop.permute.xlu0 %203
  %205 = vrot.lane.b32.xlu0 %v189, 112
  %v206 = vpop.permute.xlu0 %205
  %207 = vrot.lane.b32.xlu0 %v190, 112
  %v208 = vpop.permute.xlu0 %207
  %v215 = vadd.f32 %v175, %v198
  %v216 = vadd.f32 %v176, %v200
  %v217 = vadd.f32 %v177, %v202
  %v218 = vadd.f32 %v178, %v204
  %v219 = vadd.f32 %v179, %v206
  %v220 = vadd.f32 %v180, %v208
  %v221 = vmul.f32 %v215, 0.5
  %v222 = vmul.f32 %v216, 0.5
  %v223 = vmul.f32 %v217, 0.5
  %v224 = vmul.f32 %v218, 0.5
  %v225 = vmul.f32 %v219, 0.5
  %v226 = vmul.f32 %v220, 0.5
  %v227 = vsub.f32 %v175, %v221
  %v228 = vsub.f32 %v176, %v222
  %v229 = vsub.f32 %v177, %v223
  %v230 = vsub.f32 %v178, %v224
  %v231 = vsub.f32 %v179, %v225
  %v232 = vsub.f32 %v180, %v226
  %v233 = vmul.f32 %v227, %v227
  %v234 = vmul.f32 %v228, %v228
  %v235 = vmul.f32 %v229, %v229
  %v236 = vmul.f32 %v230, %v230
  %v237 = vmul.f32 %v231, %v231
  %v238 = vmul.f32 %v232, %v232
  %245 = vrot.lane.b32.xlu0 %v221, 16
  %v246 = vpop.permute.xlu0 %245
  %247 = vrot.lane.b32.xlu0 %v222, 16
  %v248 = vpop.permute.xlu0 %247
  %249 = vrot.lane.b32.xlu0 %v223, 16
  %v250 = vpop.permute.xlu0 %249
  %251 = vrot.lane.b32.xlu0 %v224, 16
  %v252 = vpop.permute.xlu0 %251
  %253 = vrot.lane.b32.xlu0 %v225, 16
  %v254 = vpop.permute.xlu0 %253
  %255 = vrot.lane.b32.xlu0 %v226, 16
  %v256 = vpop.permute.xlu0 %255
  %v263 = vsub.f32 %v185, %v246
  %v264 = vsub.f32 %v186, %v248
  %v265 = vsub.f32 %v187, %v250
  %v266 = vsub.f32 %v188, %v252
  %v267 = vsub.f32 %v189, %v254
  %v268 = vsub.f32 %v190, %v256
  %v269 = vmul.f32 %v263, %v263
  %v270 = vmul.f32 %v264, %v264
  %v271 = vmul.f32 %v265, %v265
  %v272 = vmul.f32 %v266, %v266
  %v273 = vmul.f32 %v267, %v267
  %v274 = vmul.f32 %v268, %v268
  %281 = vrot.lane.b32.xlu0 %v269, 112
  %v282 = vpop.permute.xlu0 %281
  %283 = vrot.lane.b32.xlu0 %v270, 112
  %v284 = vpop.permute.xlu0 %283
  %285 = vrot.lane.b32.xlu0 %v271, 112
  %v286 = vpop.permute.xlu0 %285
  %287 = vrot.lane.b32.xlu0 %v272, 112
  %v288 = vpop.permute.xlu0 %287
  %289 = vrot.lane.b32.xlu0 %v273, 112
  %v290 = vpop.permute.xlu0 %289
  %291 = vrot.lane.b32.xlu0 %v274, 112
  %v292 = vpop.permute.xlu0 %291
  %v299 = vadd.f32 %v233, %v282
  %v300 = vadd.f32 %v234, %v284
  %v301 = vadd.f32 %v235, %v286
  %v302 = vadd.f32 %v236, %v288
  %v303 = vadd.f32 %v237, %v290
  %v304 = vadd.f32 %v238, %v292
  %v305 = vmul.f32 %v299, 0.5
  %v306 = vmul.f32 %v300, 0.5
  %v307 = vmul.f32 %v301, 0.5
  %v308 = vmul.f32 %v302, 0.5
  %v309 = vmul.f32 %v303, 0.5
  %v310 = vmul.f32 %v304, 0.5
  %v311 = vadd.f32 %v305, 1e-05
  %v312 = vadd.f32 %v306, 1e-05
  %v313 = vadd.f32 %v307, 1e-05
  %v314 = vadd.f32 %v308, 1e-05
  %v315 = vadd.f32 %v309, 1e-05
  %v316 = vadd.f32 %v310, 1e-05
  %v317 = vrsqrt.pop %v311
  %v318 = vmul.f32 %v317, %v311
  %v319 = vmul.f32 %v318, %v317
  %v320 = vmul.f32 0.5, %v319
  %v321 = vsub.f32 1.5, %v320
  %v322 = vmul.f32 %v317, %v321
  %vm323 = vweird.f32 %v311
  %vm324 = vweird.f32 %v317
  %vm325 = vmor %vm323, %vm324
  %v326 = vsel %vm325, %v317, %v322
  %v327 = vrsqrt.pop %v312
  %v328 = vmul.f32 %v327, %v312
  %v329 = vmul.f32 %v328, %v327
  %v330 = vmul.f32 0.5, %v329
  %v331 = vsub.f32 1.5, %v330
  %v332 = vmul.f32 %v327, %v331
  %vm333 = vweird.f32 %v312
  %vm334 = vweird.f32 %v327
  %vm335 = vmor %vm333, %vm334
  %v336 = vsel %vm335, %v327, %v332
  %v337 = vrsqrt.pop %v313
  %v338 = vmul.f32 %v337, %v313
  %v339 = vmul.f32 %v338, %v337
  %v340 = vmul.f32 0.5, %v339
  %v341 = vsub.f32 1.5, %v340
  %v342 = vmul.f32 %v337, %v341
  %vm343 = vweird.f32 %v313
  %vm344 = vweird.f32 %v337
  %vm345 = vmor %vm343, %vm344
  %v346 = vsel %vm345, %v337, %v342
  %v347 = vrsqrt.pop %v314
  %v348 = vmul.f32 %v347, %v314
  %v349 = vmul.f32 %v348, %v347
  %v350 = vmul.f32 0.5, %v349
  %v351 = vsub.f32 1.5, %v350
  %v352 = vmul.f32 %v347, %v351
  %vm353 = vweird.f32 %v314
  %vm354 = vweird.f32 %v347
  %vm355 = vmor %vm353, %vm354
  %v356 = vsel %vm355, %v347, %v352
  %v357 = vrsqrt.pop %v315
  %v358 = vmul.f32 %v357, %v315
  %v359 = vmul.f32 %v358, %v357
  %v360 = vmul.f32 0.5, %v359
  %v361 = vsub.f32 1.5, %v360
  %v362 = vmul.f32 %v357, %v361
  %vm363 = vweird.f32 %v315
  %vm364 = vweird.f32 %v357
  %vm365 = vmor %vm363, %vm364
  %v366 = vsel %vm365, %v357, %v362
  %v367 = vrsqrt.pop %v316
  %v368 = vmul.f32 %v367, %v316
  %v369 = vmul.f32 %v368, %v367
  %v370 = vmul.f32 0.5, %v369
  %v371 = vsub.f32 1.5, %v370
  %v372 = vmul.f32 %v367, %v371
  %vm373 = vweird.f32 %v316
  %vm374 = vweird.f32 %v367
  %vm375 = vmor %vm373, %vm374
  %v376 = vsel %vm375, %v367, %v372
  %v377 = vmul.f32 %v40, %v326
  %v378 = vmul.f32 %v41, %v336
  %v379 = vmul.f32 %v42, %v346
  %v380 = vmul.f32 %v43, %v356
  %v381 = vmul.f32 %v44, %v366
  %v382 = vmul.f32 %v45, %v376
  %v383 = vmul.f32 %v221, %v377
  %v384 = vmul.f32 %v222, %v378
  %v385 = vmul.f32 %v223, %v379
  %v386 = vmul.f32 %v224, %v380
  %v387 = vmul.f32 %v225, %v381
  %v388 = vmul.f32 %v226, %v382
  %v389 = vsub.f32 %v46, %v383
  %v390 = vsub.f32 %v47, %v384
  %v391 = vsub.f32 %v48, %v385
  %v392 = vsub.f32 %v49, %v386
  %v393 = vsub.f32 %v50, %v387
  %v394 = vsub.f32 %v51, %v388
  %v395 = vmul.f32 %v175, %v377
  %v396 = vmul.f32 %v176, %v378
  %v397 = vmul.f32 %v177, %v379
  %v398 = vmul.f32 %v178, %v380
  %v399 = vmul.f32 %v179, %v381
  %v400 = vmul.f32 %v180, %v382
  %v401 = vadd.f32 %v395, %v389
  %v402 = vadd.f32 %v396, %v390
  %v403 = vadd.f32 %v397, %v391
  %v404 = vadd.f32 %v398, %v392
  %v405 = vadd.f32 %v399, %v393
  %v406 = vadd.f32 %v400, %v394
  %413 = vrot.lane.b32.xlu0 %v377, 16
  %v414 = vpop.permute.xlu0 %413
  %415 = vrot.lane.b32.xlu0 %v378, 16
  %v416 = vpop.permute.xlu0 %415
  %417 = vrot.lane.b32.xlu0 %v379, 16
  %v418 = vpop.permute.xlu0 %417
  %419 = vrot.lane.b32.xlu0 %v380, 16
  %v420 = vpop.permute.xlu0 %419
  %421 = vrot.lane.b32.xlu0 %v381, 16
  %v422 = vpop.permute.xlu0 %421
  %423 = vrot.lane.b32.xlu0 %v382, 16
  %v424 = vpop.permute.xlu0 %423
  %v431 = vmul.f32 %v185, %v414
  %v432 = vmul.f32 %v186, %v416
  %v433 = vmul.f32 %v187, %v418
  %v434 = vmul.f32 %v188, %v420
  %v435 = vmul.f32 %v189, %v422
  %v436 = vmul.f32 %v190, %v424
  %443 = vrot.lane.b32.xlu0 %v389, 16
  %v444 = vpop.permute.xlu0 %443
  %445 = vrot.lane.b32.xlu0 %v390, 16
  %v446 = vpop.permute.xlu0 %445
  %447 = vrot.lane.b32.xlu0 %v391, 16
  %v448 = vpop.permute.xlu0 %447
  %449 = vrot.lane.b32.xlu0 %v392, 16
  %v450 = vpop.permute.xlu0 %449
  %451 = vrot.lane.b32.xlu0 %v393, 16
  %v452 = vpop.permute.xlu0 %451
  %453 = vrot.lane.b32.xlu0 %v394, 16
  %v454 = vpop.permute.xlu0 %453
  %v461 = vadd.f32 %v431, %v444
  %v462 = vadd.f32 %v432, %v446
  %v463 = vadd.f32 %v433, %v448
  %v464 = vadd.f32 %v434, %v450
  %v465 = vadd.f32 %v435, %v452
  %v466 = vadd.f32 %v436, %v454
  %vm467 = vcmask 130048
  %v468 = vsel %vm467, %v401, %v461
  %v469 = vsel %vm467, %v402, %v462
  %v470 = vsel %vm467, %v403, %v463
  %v471 = vsel %vm467, %v404, %v464
  %v472 = vsel %vm467, %v405, %v465
  %v473 = vsel %vm467, %v406, %v466
  %v474 = vtanh.pop %v468
  %v475 = vtanh.pop %v469
  %v476 = vtanh.pop %v470
  %v477 = vtanh.pop %v471
  %v478 = vtanh.pop %v472
  %v479 = vtanh.pop %v473
  %v481 = vsel %vm66, %v474, 0
  %v484 = vsel %vm66, %v475, 0
  %v487 = vsel %vm66, %v476, 0
  %v490 = vsel %vm66, %v477, 0
  %v493 = vsel %vm66, %v478, 0
  %v496 = vsel %vm66, %v479, 0
  %498 = vmatpush.msra.mxu0 0.0
  %499 = vmatpush.msra.mxu0 0.0
  %500 = vmatpush.msra.mxu0 0.0
  %501 = vmatpush.msra.mxu0 0.0
  %502 = vmatpush.msra.mxu0 0.0
  %503 = vmatpush.msra.mxu0 0.0
  %504 = vmatpush.msra.mxu0 0.0
  %505 = vmatpush.msra.mxu0 0.0
  %506 = vmatpush.msra.mxu0 0.0
  %507 = vmatpush.msra.mxu0 0.0
  %508 = vmatpush.msra.mxu0 0.0
  %509 = vmatpush.msra.mxu0 0.0
  %510 = vmatpush.msra.mxu0 %v39
  %511 = vmatpush.msra.mxu0 %v38
  %512 = vmatpush.msra.mxu0 %v37
  %513 = vmatpush.msra.mxu0 %v36
  %514 = vmatmul.f32.gmra.mxu0 %v481
  %v515 = vpop.f32.mrf.mxu0
  %v516 = vadd.f32 0.0, %v515
  %517 = vmatmul.f32.gmra.mxu0 %v484
  %v518 = vpop.f32.mrf.mxu0
  %v519 = vadd.f32 0.0, %v518
  %520 = vmatmul.f32.gmra.mxu0 %v487
  %v521 = vpop.f32.mrf.mxu0
  %v522 = vadd.f32 0.0, %v521
  %523 = vmatmul.f32.gmra.mxu0 %v490
  %v524 = vpop.f32.mrf.mxu0
  %v525 = vadd.f32 0.0, %v524
  %526 = vmatmul.f32.gmra.mxu0 %v493
  %v527 = vpop.f32.mrf.mxu0
  %v528 = vadd.f32 0.0, %v527
  %529 = vmatmul.f32.gmra.mxu0 %v496
  %v530 = vpop.f32.mrf.mxu0
  %v531 = vadd.f32 0.0, %v530
  %532 = vdwg.mxu0
  %v534 = vsel %vm120, %v26, 0
  %v537 = vsel %vm120, %v27, 0
  %v540 = vsel %vm120, %v28, 0
  %v543 = vsel %vm120, %v29, 0
  %v546 = vsel %vm120, %v30, 0
  %v549 = vsel %vm120, %v31, 0
  %551 = vmatpush.msra.mxu0 0.0
  %552 = vmatpush.msra.mxu0 0.0
  %553 = vmatpush.msra.mxu0 0.0
  %554 = vmatpush.msra.mxu0 0.0
  %555 = vmatpush.msra.mxu0 0.0
  %556 = vmatpush.msra.mxu0 0.0
  %557 = vmatpush.msra.mxu0 0.0
  %558 = vmatpush.msra.mxu0 0.0
  %559 = vmatpush.msra.mxu0 0.0
  %560 = vmatpush.msra.mxu0 0.0
  %561 = vmatpush.msra.mxu0 %v531
  %562 = vmatpush.msra.mxu0 %v528
  %563 = vmatpush.msra.mxu0 %v525
  %564 = vmatpush.msra.mxu0 %v522
  %565 = vmatpush.msra.mxu0 %v519
  %566 = vmatpush.msra.mxu0 %v516
  %567 = vmatmul.f32.gmra.mxu0 %v534
  %v568 = vpop.f32.mrf.mxu0
  %v569 = vadd.f32 0.0, %v568
  %570 = vmatmul.f32.gmra.mxu0 %v537
  %v571 = vpop.f32.mrf.mxu0
  %v572 = vadd.f32 0.0, %v571
  %573 = vmatmul.f32.gmra.mxu0 %v540
  %v574 = vpop.f32.mrf.mxu0
  %v575 = vadd.f32 0.0, %v574
  %576 = vmatmul.f32.gmra.mxu0 %v543
  %v577 = vpop.f32.mrf.mxu0
  %v578 = vadd.f32 0.0, %v577
  %579 = vmatmul.f32.gmra.mxu0 %v546
  %v580 = vpop.f32.mrf.mxu0
  %v581 = vadd.f32 0.0, %v580
  %582 = vmatmul.f32.gmra.mxu0 %v549
  %v583 = vpop.f32.mrf.mxu0
  %v584 = vadd.f32 0.0, %v583
  %585 = vdwg.mxu0
  %v586 = vperm.slane %v65, 0
  %v587 = vadd.f32 %v569, %v586
  %v588 = vadd.f32 %v572, %v586
  %v589 = vadd.f32 %v575, %v586
  %v590 = vadd.f32 %v578, %v586
  %v591 = vadd.f32 %v581, %v586
  %v592 = vadd.f32 %v584, %v586
  %594 = vrot.lane.b32.xlu0 %v586, 16
  %v595 = vpop.permute.xlu0 %594
  %v597 = vadd.f32 %v569, %v595
  %v598 = vadd.f32 %v572, %v595
  %v599 = vadd.f32 %v575, %v595
  %v600 = vadd.f32 %v578, %v595
  %v601 = vadd.f32 %v581, %v595
  %v602 = vadd.f32 %v584, %v595
  %609 = vrot.lane.b32.xlu0 %v597, 112
  %v610 = vpop.permute.xlu0 %609
  %611 = vrot.lane.b32.xlu0 %v598, 112
  %v612 = vpop.permute.xlu0 %611
  %613 = vrot.lane.b32.xlu0 %v599, 112
  %v614 = vpop.permute.xlu0 %613
  %615 = vrot.lane.b32.xlu0 %v600, 112
  %v616 = vpop.permute.xlu0 %615
  %617 = vrot.lane.b32.xlu0 %v601, 112
  %v618 = vpop.permute.xlu0 %617
  %619 = vrot.lane.b32.xlu0 %v602, 112
  %v620 = vpop.permute.xlu0 %619
  %v627 = vadd.f32 %v587, %v610
  %v628 = vadd.f32 %v588, %v612
  %v629 = vadd.f32 %v589, %v614
  %v630 = vadd.f32 %v590, %v616
  %v631 = vadd.f32 %v591, %v618
  %v632 = vadd.f32 %v592, %v620
  %v633 = vmul.f32 %v627, 0.5
  %v634 = vmul.f32 %v628, 0.5
  %v635 = vmul.f32 %v629, 0.5
  %v636 = vmul.f32 %v630, 0.5
  %v637 = vmul.f32 %v631, 0.5
  %v638 = vmul.f32 %v632, 0.5
  %v639 = vsub.f32 %v587, %v633
  %v640 = vsub.f32 %v588, %v634
  %v641 = vsub.f32 %v589, %v635
  %v642 = vsub.f32 %v590, %v636
  %v643 = vsub.f32 %v591, %v637
  %v644 = vsub.f32 %v592, %v638
  %v645 = vmul.f32 %v639, %v639
  %v646 = vmul.f32 %v640, %v640
  %v647 = vmul.f32 %v641, %v641
  %v648 = vmul.f32 %v642, %v642
  %v649 = vmul.f32 %v643, %v643
  %v650 = vmul.f32 %v644, %v644
  %657 = vrot.lane.b32.xlu0 %v633, 16
  %v658 = vpop.permute.xlu0 %657
  %659 = vrot.lane.b32.xlu0 %v634, 16
  %v660 = vpop.permute.xlu0 %659
  %661 = vrot.lane.b32.xlu0 %v635, 16
  %v662 = vpop.permute.xlu0 %661
  %663 = vrot.lane.b32.xlu0 %v636, 16
  %v664 = vpop.permute.xlu0 %663
  %665 = vrot.lane.b32.xlu0 %v637, 16
  %v666 = vpop.permute.xlu0 %665
  %667 = vrot.lane.b32.xlu0 %v638, 16
  %v668 = vpop.permute.xlu0 %667
  %v675 = vsub.f32 %v597, %v658
  %v676 = vsub.f32 %v598, %v660
  %v677 = vsub.f32 %v599, %v662
  %v678 = vsub.f32 %v600, %v664
  %v679 = vsub.f32 %v601, %v666
  %v680 = vsub.f32 %v602, %v668
  %v681 = vmul.f32 %v675, %v675
  %v682 = vmul.f32 %v676, %v676
  %v683 = vmul.f32 %v677, %v677
  %v684 = vmul.f32 %v678, %v678
  %v685 = vmul.f32 %v679, %v679
  %v686 = vmul.f32 %v680, %v680
  %693 = vrot.lane.b32.xlu0 %v681, 112
  %v694 = vpop.permute.xlu0 %693
  %695 = vrot.lane.b32.xlu0 %v682, 112
  %v696 = vpop.permute.xlu0 %695
  %697 = vrot.lane.b32.xlu0 %v683, 112
  %v698 = vpop.permute.xlu0 %697
  %699 = vrot.lane.b32.xlu0 %v684, 112
  %v700 = vpop.permute.xlu0 %699
  %701 = vrot.lane.b32.xlu0 %v685, 112
  %v702 = vpop.permute.xlu0 %701
  %703 = vrot.lane.b32.xlu0 %v686, 112
  %v704 = vpop.permute.xlu0 %703
  %v711 = vadd.f32 %v645, %v694
  %v712 = vadd.f32 %v646, %v696
  %v713 = vadd.f32 %v647, %v698
  %v714 = vadd.f32 %v648, %v700
  %v715 = vadd.f32 %v649, %v702
  %v716 = vadd.f32 %v650, %v704
  %v717 = vmul.f32 %v711, 0.5
  %v718 = vmul.f32 %v712, 0.5
  %v719 = vmul.f32 %v713, 0.5
  %v720 = vmul.f32 %v714, 0.5
  %v721 = vmul.f32 %v715, 0.5
  %v722 = vmul.f32 %v716, 0.5
  %v723 = vadd.f32 %v717, 1e-05
  %v724 = vadd.f32 %v718, 1e-05
  %v725 = vadd.f32 %v719, 1e-05
  %v726 = vadd.f32 %v720, 1e-05
  %v727 = vadd.f32 %v721, 1e-05
  %v728 = vadd.f32 %v722, 1e-05
  %v729 = vrsqrt.pop %v723
  %v730 = vmul.f32 %v729, %v723
  %v731 = vmul.f32 %v730, %v729
  %v732 = vmul.f32 0.5, %v731
  %v733 = vsub.f32 1.5, %v732
  %v734 = vmul.f32 %v729, %v733
  %vm735 = vweird.f32 %v723
  %vm736 = vweird.f32 %v729
  %vm737 = vmor %vm735, %vm736
  %v738 = vsel %vm737, %v729, %v734
  %v739 = vrsqrt.pop %v724
  %v740 = vmul.f32 %v739, %v724
  %v741 = vmul.f32 %v740, %v739
  %v742 = vmul.f32 0.5, %v741
  %v743 = vsub.f32 1.5, %v742
  %v744 = vmul.f32 %v739, %v743
  %vm745 = vweird.f32 %v724
  %vm746 = vweird.f32 %v739
  %vm747 = vmor %vm745, %vm746
  %v748 = vsel %vm747, %v739, %v744
  %v749 = vrsqrt.pop %v725
  %v750 = vmul.f32 %v749, %v725
  %v751 = vmul.f32 %v750, %v749
  %v752 = vmul.f32 0.5, %v751
  %v753 = vsub.f32 1.5, %v752
  %v754 = vmul.f32 %v749, %v753
  %vm755 = vweird.f32 %v725
  %vm756 = vweird.f32 %v749
  %vm757 = vmor %vm755, %vm756
  %v758 = vsel %vm757, %v749, %v754
  %v759 = vrsqrt.pop %v726
  %v760 = vmul.f32 %v759, %v726
  %v761 = vmul.f32 %v760, %v759
  %v762 = vmul.f32 0.5, %v761
  %v763 = vsub.f32 1.5, %v762
  %v764 = vmul.f32 %v759, %v763
  %vm765 = vweird.f32 %v726
  %vm766 = vweird.f32 %v759
  %vm767 = vmor %vm765, %vm766
  %v768 = vsel %vm767, %v759, %v764
  %v769 = vrsqrt.pop %v727
  %v770 = vmul.f32 %v769, %v727
  %v771 = vmul.f32 %v770, %v769
  %v772 = vmul.f32 0.5, %v771
  %v773 = vsub.f32 1.5, %v772
  %v774 = vmul.f32 %v769, %v773
  %vm775 = vweird.f32 %v727
  %vm776 = vweird.f32 %v769
  %vm777 = vmor %vm775, %vm776
  %v778 = vsel %vm777, %v769, %v774
  %v779 = vrsqrt.pop %v728
  %v780 = vmul.f32 %v779, %v728
  %v781 = vmul.f32 %v780, %v779
  %v782 = vmul.f32 0.5, %v781
  %v783 = vsub.f32 1.5, %v782
  %v784 = vmul.f32 %v779, %v783
  %vm785 = vweird.f32 %v728
  %vm786 = vweird.f32 %v779
  %vm787 = vmor %vm785, %vm786
  %v788 = vsel %vm787, %v779, %v784
  %v789 = vmul.f32 %v52, %v738
  %v790 = vmul.f32 %v53, %v748
  %v791 = vmul.f32 %v54, %v758
  %v792 = vmul.f32 %v55, %v768
  %v793 = vmul.f32 %v56, %v778
  %v794 = vmul.f32 %v57, %v788
  %v795 = vmul.f32 %v633, %v789
  %v796 = vmul.f32 %v634, %v790
  %v797 = vmul.f32 %v635, %v791
  %v798 = vmul.f32 %v636, %v792
  %v799 = vmul.f32 %v637, %v793
  %v800 = vmul.f32 %v638, %v794
  %v801 = vsub.f32 %v58, %v795
  %v802 = vsub.f32 %v59, %v796
  %v803 = vsub.f32 %v60, %v797
  %v804 = vsub.f32 %v61, %v798
  %v805 = vsub.f32 %v62, %v799
  %v806 = vsub.f32 %v63, %v800
  %v807 = vmul.f32 %v587, %v789
  %v808 = vmul.f32 %v588, %v790
  %v809 = vmul.f32 %v589, %v791
  %v810 = vmul.f32 %v590, %v792
  %v811 = vmul.f32 %v591, %v793
  %v812 = vmul.f32 %v592, %v794
  %v813 = vadd.f32 %v807, %v801
  %v814 = vadd.f32 %v808, %v802
  %v815 = vadd.f32 %v809, %v803
  %v816 = vadd.f32 %v810, %v804
  %v817 = vadd.f32 %v811, %v805
  %v818 = vadd.f32 %v812, %v806
  %825 = vrot.lane.b32.xlu0 %v789, 16
  %v826 = vpop.permute.xlu0 %825
  %827 = vrot.lane.b32.xlu0 %v790, 16
  %v828 = vpop.permute.xlu0 %827
  %829 = vrot.lane.b32.xlu0 %v791, 16
  %v830 = vpop.permute.xlu0 %829
  %831 = vrot.lane.b32.xlu0 %v792, 16
  %v832 = vpop.permute.xlu0 %831
  %833 = vrot.lane.b32.xlu0 %v793, 16
  %v834 = vpop.permute.xlu0 %833
  %835 = vrot.lane.b32.xlu0 %v794, 16
  %v836 = vpop.permute.xlu0 %835
  %v843 = vmul.f32 %v597, %v826
  %v844 = vmul.f32 %v598, %v828
  %v845 = vmul.f32 %v599, %v830
  %v846 = vmul.f32 %v600, %v832
  %v847 = vmul.f32 %v601, %v834
  %v848 = vmul.f32 %v602, %v836
  %855 = vrot.lane.b32.xlu0 %v801, 16
  %v856 = vpop.permute.xlu0 %855
  %857 = vrot.lane.b32.xlu0 %v802, 16
  %v858 = vpop.permute.xlu0 %857
  %859 = vrot.lane.b32.xlu0 %v803, 16
  %v860 = vpop.permute.xlu0 %859
  %861 = vrot.lane.b32.xlu0 %v804, 16
  %v862 = vpop.permute.xlu0 %861
  %863 = vrot.lane.b32.xlu0 %v805, 16
  %v864 = vpop.permute.xlu0 %863
  %865 = vrot.lane.b32.xlu0 %v806, 16
  %v866 = vpop.permute.xlu0 %865
  %v873 = vadd.f32 %v843, %v856
  %v874 = vadd.f32 %v844, %v858
  %v875 = vadd.f32 %v845, %v860
  %v876 = vadd.f32 %v846, %v862
  %v877 = vadd.f32 %v847, %v864
  %v878 = vadd.f32 %v848, %v866
  %v879 = vsel %vm467, %v813, %v873
  %v880 = vsel %vm467, %v814, %v874
  %v881 = vsel %vm467, %v815, %v875
  %v882 = vsel %vm467, %v816, %v876
  %v883 = vsel %vm467, %v817, %v877
  %v884 = vsel %vm467, %v818, %v878
  %v885 = vtanh.pop %v879
  %v886 = vtanh.pop %v880
  %v887 = vtanh.pop %v881
  %v888 = vtanh.pop %v882
  %v889 = vtanh.pop %v883
  %v890 = vtanh.pop %v884
  %v891 = vadd.f32 %v885, %v14
  %v892 = vadd.f32 %v886, %v15
  %v893 = vadd.f32 %v887, %v16
  %v894 = vadd.f32 %v888, %v17
  %v895 = vadd.f32 %v889, %v18
  %v896 = vadd.f32 %v890, %v19
  %897 = vst.msk [vmem:[%s3] sm:$0xff] %vm66, %v891
  %898 = vst.msk [vmem:[%s3 + $0x8] sm:$0xff] %vm66, %v892
  %899 = vst.msk [vmem:[%s3 + $0x10] sm:$0xff] %vm66, %v893
  %900 = vst.msk [vmem:[%s3 + $0x18] sm:$0xff] %vm66, %v894
  %901 = vst.msk [vmem:[%s3 + $0x20] sm:$0xff] %vm66, %v895
  %902 = vst.msk [vmem:[%s3 + $0x28] sm:$0xff] %vm66, %v896
  // Predicated region
  $region14: #{gc_block.1} parent=0 // pred_check
    _
  $region15: #{gc_block.1} parent=0 // pred_check_branch
    %904 = sbr.rel (0) target = $region17
  $region16: #{gc_block.1} parent=0 // pred_region
    _
  $region17: #{gc_block.1} parent=0 // pred_fallthru
    _
  // Predicated region
  $region18: #{gc_block.1} parent=0 // pred_check
    _
  $region19: #{gc_block.1} parent=0 // pred_check_branch
    %906 = sbr.rel (0) target = $region21
  $region20: #{gc_block.1} parent=0 // pred_region
    _
  $region21: #{gc_block.1} parent=0 // pred_fallthru
    _

</llo_original>
